<compile_context>
chip_gen: v7x
topology: tpu7x:2x2x1
jax: 0.10.0
libtpu: 0.0.40
codegen_flags: <defaults>
</compile_context>

<pallas_src>
import functools

import jax
import jax.numpy as jnp
from jax.experimental import pallas as pl
from jax.experimental.pallas import tpu as pltpu

NEG_SLOPE = 0.01  # nn.LeakyReLU default


def _leaky_relu(x):
    return jnp.where(x > 0, x, NEG_SLOPE * x)


def _round_up(n, m):
    return ((n + m - 1) // m) * m


def disc_kernel(x_ref, w1_ref, b1_ref, w2_ref, b2_ref, wf_ref, bf_ref, o_ref):
    # Entire residual-MLP hot path runs in VMEM on the current batch tile.
    tb = x_ref.shape[0]
    hidden = w2_ref.shape[0]

    # feature: Linear(ts_dim, hidden) + LeakyReLU (bf16 matmul, f32 accumulate)
    x16 = x_ref[...].astype(jnp.bfloat16)
    h = jnp.dot(x16, w1_ref[...], preferred_element_type=jnp.float32)
    out = _leaky_relu(h + b1_ref[...])                      # f32 (tb, hidden)

    # 7 residual applications of the SAME linear_block (shared W2/b2).
    w2 = w2_ref[...]                                        # bf16 (hidden, hidden)
    b2b = jnp.broadcast_to(b2_ref[...], (tb, hidden))       # hoisted broadcast
    for _ in range(7):
        blk = jnp.dot(out.astype(jnp.bfloat16), w2,
                      preferred_element_type=jnp.float32) + b2b
        out = out + _leaky_relu(blk)

    # fc: Linear(hidden, out_pad)  -- out_pad is lane-dense (multiple of 128)
    y = jnp.dot(out.astype(jnp.bfloat16), wf_ref[...],
                preferred_element_type=jnp.float32) + bf_ref[...]
    o_ref[...] = y.astype(o_ref.dtype)


@functools.partial(jax.jit, static_argnames=("tile_b",))
def conv_discriminator(x, w1, b1, w2, b2, wf, bf, *, tile_b=256):
    B, ts_dim = x.shape
    hidden = w1.shape[1]
    out_dim = wf.shape[1]

    # Batch tile: whole (8-aligned) batch in one step when tiny, else tile_b
    # rows per step (keeps >=2 grid steps at large B so "parallel" can shard
    # tiles across the 2 TensorCores on v7x).
    tb = min(tile_b, _round_up(B, 8))
    B_pad = _round_up(B, tb)
    out_pad = _round_up(out_dim, 128)   # lane-dense output block

    xp = x.astype(jnp.float32)
    if B_pad != B:
        xp = jnp.pad(xp, ((0, B_pad - B), (0, 0)))

    # bf16 weights for the MXU; biases stay f32 (added to f32 accumulators).
    w1b = w1.astype(jnp.bfloat16)
    w2b = w2.astype(jnp.bfloat16)
    wfb = jnp.pad(wf.astype(jnp.float32),
                  ((0, 0), (0, out_pad - out_dim))).astype(jnp.bfloat16)
    b1f = b1.astype(jnp.float32)
    b2f = b2.astype(jnp.float32)
    bfp = jnp.pad(bf.astype(jnp.float32), ((0, 0), (0, out_pad - out_dim)))

    full = lambda i: (0, 0)  # weights/biases: whole array at every grid step

    yp = pl.pallas_call(
        disc_kernel,
        out_shape=jax.ShapeDtypeStruct((B_pad, out_pad), jnp.float32),
        grid_spec=pltpu.PrefetchScalarGridSpec(
            num_scalar_prefetch=0,
            grid=(B_pad // tb,),
            in_specs=[
                pl.BlockSpec((tb, ts_dim), lambda i: (i, 0)),
                pl.BlockSpec((ts_dim, hidden), full),
                pl.BlockSpec((1, hidden), full),
                pl.BlockSpec((hidden, hidden), full),
                pl.BlockSpec((1, hidden), full),
                pl.BlockSpec((hidden, out_pad), full),
                pl.BlockSpec((1, out_pad), full),
            ],
            out_specs=pl.BlockSpec((tb, out_pad), lambda i: (i, 0)),
        ),
        compiler_params=pltpu.CompilerParams(
            dimension_semantics=("parallel",)
        ),
    )(xp, w1b, b1f, w2b, b2f, wfb, bfp)

    return yp[:B, :out_dim].astype(x.dtype)


def init_params(key, ts_dim, hidden_dim, out_dim, dtype=jnp.float32):
    """Deterministic PyTorch-style uniform(-1/sqrt(fan_in), 1/sqrt(fan_in)) init.

    Weights are stored as (in_features, out_features) for x @ W."""
    ks = jax.random.split(key, 6)

    def lin(kw, kb, fan_in, fan_out):
        bound = 1.0 / jnp.sqrt(jnp.array(fan_in, jnp.float32))
        w = jax.random.uniform(kw, (fan_in, fan_out), dtype, -bound, bound)
        b = jax.random.uniform(kb, (1, fan_out), dtype, -bound, bound)
        return w, b

    w1, b1 = lin(ks[0], ks[1], ts_dim, hidden_dim)
    w2, b2 = lin(ks[2], ks[3], hidden_dim, hidden_dim)
    wf, bf = lin(ks[4], ks[5], hidden_dim, out_dim)
    return w1, b1, w2, b2, wf, bf


def reference_forward(x, w1, b1, w2, b2, wf, bf):
    """Pure-JAX reference mirroring the PyTorch forward (with the same bf16
    weight/activation rounding + f32 accumulation the kernel uses)."""
    bf16, f32 = jnp.bfloat16, jnp.float32
    w1b, w2b, wfb = (w.astype(bf16) for w in (w1, w2, wf))
    out = _leaky_relu(
        jnp.dot(x.astype(bf16), w1b, preferred_element_type=f32) + b1)
    for _ in range(7):
        blk = jnp.dot(out.astype(bf16), w2b, preferred_element_type=f32) + b2
        out = out + _leaky_relu(blk)
    return jnp.dot(out.astype(bf16), wfb, preferred_element_type=f32) + bf


if __name__ == "__main__":
    # Small shapes consistent with the module: ts_dim=32, hidden_dim=128, out_dim=1.
    B, TS_DIM, HIDDEN, OUT = 16, 32, 128, 1

    key = jax.random.PRNGKey(0)
    kx, kp = jax.random.split(key)
    x = jax.random.normal(kx, (B, TS_DIM), jnp.float32)
    params = init_params(kp, TS_DIM, HIDDEN, OUT)

    y = conv_discriminator(x, *params)
    y = jax.block_until_ready(y)

    y_ref = reference_forward(x, *params)
    assert y.shape == (B, OUT)
    assert jnp.allclose(y, y_ref, atol=1e-2, rtol=1e-2), "mismatch vs reference"

    print("KERNEL_OK")
</pallas_src>

<mosaic_0001>
module attributes {stable_mosaic.version = 11 : i64} {
  func.func @disc_kernel(%arg0: i32, %arg1: memref<16x32xf32, #tpu.memory_space<vmem>>, %arg2: memref<32x128xbf16, #tpu.memory_space<vmem>>, %arg3: memref<1x128xf32, #tpu.memory_space<vmem>>, %arg4: memref<128x128xbf16, #tpu.memory_space<vmem>>, %arg5: memref<1x128xf32, #tpu.memory_space<vmem>>, %arg6: memref<128x128xbf16, #tpu.memory_space<vmem>>, %arg7: memref<1x128xf32, #tpu.memory_space<vmem>>, %arg8: memref<16x128xf32, #tpu.memory_space<vmem>>) attributes {dimension_semantics = [#tpu.dimension_semantics<parallel>], iteration_bounds = array<i64: 1>, scalar_prefetch = 0 : i64, scratch_operands = 0 : i64, tpu.core_type = #tpu.core_type<tc>, window_params = [{transform_indices = @transform_0, window_bounds = array<i64: 16, 32>}, {pipeline_mode = #tpu.pipeline_mode<synchronous>, transform_indices = @transform_1, window_bounds = array<i64: 32, 128>}, {pipeline_mode = #tpu.pipeline_mode<synchronous>, transform_indices = @transform_2, window_bounds = array<i64: 1, 128>}, {pipeline_mode = #tpu.pipeline_mode<synchronous>, transform_indices = @transform_3, window_bounds = array<i64: 128, 128>}, {pipeline_mode = #tpu.pipeline_mode<synchronous>, transform_indices = @transform_4, window_bounds = array<i64: 1, 128>}, {pipeline_mode = #tpu.pipeline_mode<synchronous>, transform_indices = @transform_5, window_bounds = array<i64: 128, 128>}, {pipeline_mode = #tpu.pipeline_mode<synchronous>, transform_indices = @transform_6, window_bounds = array<i64: 1, 128>}, {transform_indices = @transform_7, window_bounds = array<i64: 16, 128>}]} {
    %c0 = arith.constant 0 : index
    %c0_0 = arith.constant 0 : index
    %0 = vector.load %arg1[%c0, %c0_0] : memref<16x32xf32, #tpu.memory_space<vmem>>, vector<16x32xf32>
    %1 = arith.truncf %0 : vector<16x32xf32> to vector<16x32xbf16>
    %c0_1 = arith.constant 0 : index
    %c0_2 = arith.constant 0 : index
    %2 = vector.load %arg2[%c0_1, %c0_2] : memref<32x128xbf16, #tpu.memory_space<vmem>>, vector<32x128xbf16>
    %cst = arith.constant dense<0.000000e+00> : vector<16x128xf32>
    %3 = tpu.matmul %1, %2, %cst {dimension_numbers = #tpu.dot_dimension_numbers<[1], [0], [0], [1], [0, 0, 1, 1], [], []>} : vector<16x32xbf16>, vector<32x128xbf16>, vector<16x128xf32> -> vector<16x128xf32>
    %c0_3 = arith.constant 0 : index
    %c0_4 = arith.constant 0 : index
    %4 = vector.load %arg3[%c0_3, %c0_4] : memref<1x128xf32, #tpu.memory_space<vmem>>, vector<1x128xf32>
    %5 = vector.broadcast %4 : vector<1x128xf32> to vector<16x128xf32>
    %6 = arith.addf %3, %5 : vector<16x128xf32>
    %cst_5 = arith.constant 0.000000e+00 : f32
    %7 = vector.broadcast %cst_5 : f32 to vector<16x128xf32>
    %8 = arith.cmpf ogt, %6, %7 : vector<16x128xf32>
    %cst_6 = arith.constant 0.00999999977 : f32
    %9 = vector.broadcast %cst_6 : f32 to vector<16x128xf32>
    %10 = arith.mulf %9, %6 : vector<16x128xf32>
    %11 = arith.select %8, %6, %10 : vector<16x128xi1>, vector<16x128xf32>
    %c0_7 = arith.constant 0 : index
    %c0_8 = arith.constant 0 : index
    %12 = vector.load %arg4[%c0_7, %c0_8] : memref<128x128xbf16, #tpu.memory_space<vmem>>, vector<128x128xbf16>
    %c0_9 = arith.constant 0 : index
    %c0_10 = arith.constant 0 : index
    %13 = vector.load %arg5[%c0_9, %c0_10] : memref<1x128xf32, #tpu.memory_space<vmem>>, vector<1x128xf32>
    %14 = vector.shape_cast %13 : vector<1x128xf32> to vector<1x128xf32>
    %15 = vector.broadcast %14 : vector<1x128xf32> to vector<16x128xf32>
    %16 = arith.truncf %11 : vector<16x128xf32> to vector<16x128xbf16>
    %cst_11 = arith.constant dense<0.000000e+00> : vector<16x128xf32>
    %17 = tpu.matmul %16, %12, %cst_11 {dimension_numbers = #tpu.dot_dimension_numbers<[1], [0], [0], [1], [0, 0, 1, 1], [], []>} : vector<16x128xbf16>, vector<128x128xbf16>, vector<16x128xf32> -> vector<16x128xf32>
    %18 = arith.addf %17, %15 : vector<16x128xf32>
    %cst_12 = arith.constant 0.000000e+00 : f32
    %19 = vector.broadcast %cst_12 : f32 to vector<16x128xf32>
    %20 = arith.cmpf ogt, %18, %19 : vector<16x128xf32>
    %cst_13 = arith.constant 0.00999999977 : f32
    %21 = vector.broadcast %cst_13 : f32 to vector<16x128xf32>
    %22 = arith.mulf %21, %18 : vector<16x128xf32>
    %23 = arith.select %20, %18, %22 : vector<16x128xi1>, vector<16x128xf32>
    %24 = arith.addf %11, %23 : vector<16x128xf32>
    %25 = arith.truncf %24 : vector<16x128xf32> to vector<16x128xbf16>
    %cst_14 = arith.constant dense<0.000000e+00> : vector<16x128xf32>
    %26 = tpu.matmul %25, %12, %cst_14 {dimension_numbers = #tpu.dot_dimension_numbers<[1], [0], [0], [1], [0, 0, 1, 1], [], []>} : vector<16x128xbf16>, vector<128x128xbf16>, vector<16x128xf32> -> vector<16x128xf32>
    %27 = arith.addf %26, %15 : vector<16x128xf32>
    %cst_15 = arith.constant 0.000000e+00 : f32
    %28 = vector.broadcast %cst_15 : f32 to vector<16x128xf32>
    %29 = arith.cmpf ogt, %27, %28 : vector<16x128xf32>
    %cst_16 = arith.constant 0.00999999977 : f32
    %30 = vector.broadcast %cst_16 : f32 to vector<16x128xf32>
    %31 = arith.mulf %30, %27 : vector<16x128xf32>
    %32 = arith.select %29, %27, %31 : vector<16x128xi1>, vector<16x128xf32>
    %33 = arith.addf %24, %32 : vector<16x128xf32>
    %34 = arith.truncf %33 : vector<16x128xf32> to vector<16x128xbf16>
    %cst_17 = arith.constant dense<0.000000e+00> : vector<16x128xf32>
    %35 = tpu.matmul %34, %12, %cst_17 {dimension_numbers = #tpu.dot_dimension_numbers<[1], [0], [0], [1], [0, 0, 1, 1], [], []>} : vector<16x128xbf16>, vector<128x128xbf16>, vector<16x128xf32> -> vector<16x128xf32>
    %36 = arith.addf %35, %15 : vector<16x128xf32>
    %cst_18 = arith.constant 0.000000e+00 : f32
    %37 = vector.broadcast %cst_18 : f32 to vector<16x128xf32>
    %38 = arith.cmpf ogt, %36, %37 : vector<16x128xf32>
    %cst_19 = arith.constant 0.00999999977 : f32
    %39 = vector.broadcast %cst_19 : f32 to vector<16x128xf32>
    %40 = arith.mulf %39, %36 : vector<16x128xf32>
    %41 = arith.select %38, %36, %40 : vector<16x128xi1>, vector<16x128xf32>
    %42 = arith.addf %33, %41 : vector<16x128xf32>
    %43 = arith.truncf %42 : vector<16x128xf32> to vector<16x128xbf16>
    %cst_20 = arith.constant dense<0.000000e+00> : vector<16x128xf32>
    %44 = tpu.matmul %43, %12, %cst_20 {dimension_numbers = #tpu.dot_dimension_numbers<[1], [0], [0], [1], [0, 0, 1, 1], [], []>} : vector<16x128xbf16>, vector<128x128xbf16>, vector<16x128xf32> -> vector<16x128xf32>
    %45 = arith.addf %44, %15 : vector<16x128xf32>
    %cst_21 = arith.constant 0.000000e+00 : f32
    %46 = vector.broadcast %cst_21 : f32 to vector<16x128xf32>
    %47 = arith.cmpf ogt, %45, %46 : vector<16x128xf32>
    %cst_22 = arith.constant 0.00999999977 : f32
    %48 = vector.broadcast %cst_22 : f32 to vector<16x128xf32>
    %49 = arith.mulf %48, %45 : vector<16x128xf32>
    %50 = arith.select %47, %45, %49 : vector<16x128xi1>, vector<16x128xf32>
    %51 = arith.addf %42, %50 : vector<16x128xf32>
    %52 = arith.truncf %51 : vector<16x128xf32> to vector<16x128xbf16>
    %cst_23 = arith.constant dense<0.000000e+00> : vector<16x128xf32>
    %53 = tpu.matmul %52, %12, %cst_23 {dimension_numbers = #tpu.dot_dimension_numbers<[1], [0], [0], [1], [0, 0, 1, 1], [], []>} : vector<16x128xbf16>, vector<128x128xbf16>, vector<16x128xf32> -> vector<16x128xf32>
    %54 = arith.addf %53, %15 : vector<16x128xf32>
    %cst_24 = arith.constant 0.000000e+00 : f32
    %55 = vector.broadcast %cst_24 : f32 to vector<16x128xf32>
    %56 = arith.cmpf ogt, %54, %55 : vector<16x128xf32>
    %cst_25 = arith.constant 0.00999999977 : f32
    %57 = vector.broadcast %cst_25 : f32 to vector<16x128xf32>
    %58 = arith.mulf %57, %54 : vector<16x128xf32>
    %59 = arith.select %56, %54, %58 : vector<16x128xi1>, vector<16x128xf32>
    %60 = arith.addf %51, %59 : vector<16x128xf32>
    %61 = arith.truncf %60 : vector<16x128xf32> to vector<16x128xbf16>
    %cst_26 = arith.constant dense<0.000000e+00> : vector<16x128xf32>
    %62 = tpu.matmul %61, %12, %cst_26 {dimension_numbers = #tpu.dot_dimension_numbers<[1], [0], [0], [1], [0, 0, 1, 1], [], []>} : vector<16x128xbf16>, vector<128x128xbf16>, vector<16x128xf32> -> vector<16x128xf32>
    %63 = arith.addf %62, %15 : vector<16x128xf32>
    %cst_27 = arith.constant 0.000000e+00 : f32
    %64 = vector.broadcast %cst_27 : f32 to vector<16x128xf32>
    %65 = arith.cmpf ogt, %63, %64 : vector<16x128xf32>
    %cst_28 = arith.constant 0.00999999977 : f32
    %66 = vector.broadcast %cst_28 : f32 to vector<16x128xf32>
    %67 = arith.mulf %66, %63 : vector<16x128xf32>
    %68 = arith.select %65, %63, %67 : vector<16x128xi1>, vector<16x128xf32>
    %69 = arith.addf %60, %68 : vector<16x128xf32>
    %70 = arith.truncf %69 : vector<16x128xf32> to vector<16x128xbf16>
    %cst_29 = arith.constant dense<0.000000e+00> : vector<16x128xf32>
    %71 = tpu.matmul %70, %12, %cst_29 {dimension_numbers = #tpu.dot_dimension_numbers<[1], [0], [0], [1], [0, 0, 1, 1], [], []>} : vector<16x128xbf16>, vector<128x128xbf16>, vector<16x128xf32> -> vector<16x128xf32>
    %72 = arith.addf %71, %15 : vector<16x128xf32>
    %cst_30 = arith.constant 0.000000e+00 : f32
    %73 = vector.broadcast %cst_30 : f32 to vector<16x128xf32>
    %74 = arith.cmpf ogt, %72, %73 : vector<16x128xf32>
    %cst_31 = arith.constant 0.00999999977 : f32
    %75 = vector.broadcast %cst_31 : f32 to vector<16x128xf32>
    %76 = arith.mulf %75, %72 : vector<16x128xf32>
    %77 = arith.select %74, %72, %76 : vector<16x128xi1>, vector<16x128xf32>
    %78 = arith.addf %69, %77 : vector<16x128xf32>
    %79 = arith.truncf %78 : vector<16x128xf32> to vector<16x128xbf16>
    %c0_32 = arith.constant 0 : index
    %c0_33 = arith.constant 0 : index
    %80 = vector.load %arg6[%c0_32, %c0_33] : memref<128x128xbf16, #tpu.memory_space<vmem>>, vector<128x128xbf16>
    %cst_34 = arith.constant dense<0.000000e+00> : vector<16x128xf32>
    %81 = tpu.matmul %79, %80, %cst_34 {dimension_numbers = #tpu.dot_dimension_numbers<[1], [0], [0], [1], [0, 0, 1, 1], [], []>} : vector<16x128xbf16>, vector<128x128xbf16>, vector<16x128xf32> -> vector<16x128xf32>
    %c0_35 = arith.constant 0 : index
    %c0_36 = arith.constant 0 : index
    %82 = vector.load %arg7[%c0_35, %c0_36] : memref<1x128xf32, #tpu.memory_space<vmem>>, vector<1x128xf32>
    %83 = vector.broadcast %82 : vector<1x128xf32> to vector<16x128xf32>
    %84 = arith.addf %81, %83 : vector<16x128xf32>
    %c0_37 = arith.constant 0 : index
    %c0_38 = arith.constant 0 : index
    %85 = vector.load %arg8[%c0_37, %c0_38] : memref<16x128xf32, #tpu.memory_space<vmem>>, vector<16x128xf32>
    tpu.vector_store %arg8[%c0_37, %c0_38], %84 {strides = array<i32>} : memref<16x128xf32, #tpu.memory_space<vmem>>, vector<16x128xf32>,
    return
  }
  func.func @transform_0(%arg0: i32) -> (i32, i32) {
    %c0_i32 = arith.constant 0 : i32
    %c0_i32_0 = arith.constant 0 : i32
    return %arg0, %c0_i32 : i32, i32
  }
  func.func @transform_1(%arg0: i32) -> (i32, i32) {
    %c0_i32 = arith.constant 0 : i32
    %c0_i32_0 = arith.constant 0 : i32
    %c0_i32_1 = arith.constant 0 : i32
    return %c0_i32, %c0_i32_0 : i32, i32
  }
  func.func @transform_2(%arg0: i32) -> (i32, i32) {
    %c0_i32 = arith.constant 0 : i32
    %c0_i32_0 = arith.constant 0 : i32
    %c0_i32_1 = arith.constant 0 : i32
    return %c0_i32, %c0_i32_0 : i32, i32
  }
  func.func @transform_3(%arg0: i32) -> (i32, i32) {
    %c0_i32 = arith.constant 0 : i32
    %c0_i32_0 = arith.constant 0 : i32
    %c0_i32_1 = arith.constant 0 : i32
    return %c0_i32, %c0_i32_0 : i32, i32
  }
  func.func @transform_4(%arg0: i32) -> (i32, i32) {
    %c0_i32 = arith.constant 0 : i32
    %c0_i32_0 = arith.constant 0 : i32
    %c0_i32_1 = arith.constant 0 : i32
    return %c0_i32, %c0_i32_0 : i32, i32
  }
  func.func @transform_5(%arg0: i32) -> (i32, i32) {
    %c0_i32 = arith.constant 0 : i32
    %c0_i32_0 = arith.constant 0 : i32
    %c0_i32_1 = arith.constant 0 : i32
    return %c0_i32, %c0_i32_0 : i32, i32
  }
  func.func @transform_6(%arg0: i32) -> (i32, i32) {
    %c0_i32 = arith.constant 0 : i32
    %c0_i32_0 = arith.constant 0 : i32
    %c0_i32_1 = arith.constant 0 : i32
    return %c0_i32, %c0_i32_0 : i32, i32
  }
  func.func @transform_7(%arg0: i32) -> (i32, i32) {
    %c0_i32 = arith.constant 0 : i32
    %c0_i32_0 = arith.constant 0 : i32
    return %arg0, %c0_i32 : i32, i32
  }
}

</mosaic_0001>

<llo_original>
// kernel: conv_discriminator.1
$region0: #{conv_discriminator.1}
  #allocation0 [shape = 'u32[]', space=smem, size = 0x4, offset = 0x4, fixed_abs, tag = 'smem constant byte address 0x4 - core index']
  #allocation1 [shape = 'u32[144,128]{1,0:T(1,128)}', space=vmem, size = 0x12000, scoped, tag = 'internal scratch']
  %s0 = inlined_call_operand.vmem [shape: f32[16,32], index: 0, kind: input, shape index: {}]
  %s1 = inlined_call_operand.vmem [shape: bf16[32,128], index: 1, kind: input, shape index: {}]
  %s2 = inlined_call_operand.vmem [shape: f32[1,128], index: 2, kind: input, shape index: {}]
  %s3 = inlined_call_operand.vmem [shape: bf16[128,128], index: 3, kind: input, shape index: {}]
  %s4 = inlined_call_operand.vmem [shape: f32[1,128], index: 4, kind: input, shape index: {}]
  %s5 = inlined_call_operand.vmem [shape: bf16[128,128], index: 5, kind: input, shape index: {}]
  %s6 = inlined_call_operand.vmem [shape: f32[1,128], index: 6, kind: input, shape index: {}]
  %s7 = inlined_call_operand.vmem [shape: f32[16,128], index: 7, kind: output, shape index: {}]
  %s8 = sld [smem:[#allocation0]]
  $region38: #{conv_discriminator.1} parent=0
    _
  %s10 = ssub.s32 1, %s8
  %s11 = scalar_select 0, %s10, %s8
  // Predicated region
  $region2: #{conv_discriminator.1} parent=0 // pred_check
    _
  $region3: #{conv_discriminator.1} parent=0 // pred_check_branch
    %13 = sbr.rel (0) target = $region5
  $region4: #{conv_discriminator.1} parent=0 // pred_region
    _
  $region5: #{conv_discriminator.1} parent=0 // pred_fallthru
    _
  // Predicated region
  $region6: #{conv_discriminator.1} parent=0 // pred_check
    _
  $region7: #{conv_discriminator.1} parent=0 // pred_check_branch
    %15 = sbr.rel (0) target = $region9
  $region8: #{conv_discriminator.1} parent=0 // pred_region
    _
  $region9: #{conv_discriminator.1} parent=0 // pred_fallthru
    _
  // Predicated region
  $region10: #{conv_discriminator.1} parent=0 // pred_check
    _
  $region11: #{conv_discriminator.1} parent=0 // pred_check_branch
    %17 = sbr.rel (0) target = $region13
  $region12: #{conv_discriminator.1} parent=0 // pred_region
    _
  $region13: #{conv_discriminator.1} parent=0 // pred_fallthru
    _
  // Predicated region
  $region14: #{conv_discriminator.1} parent=0 // pred_check
    _
  $region15: #{conv_discriminator.1} parent=0 // pred_check_branch
    %19 = sbr.rel (0) target = $region17
  $region16: #{conv_discriminator.1} parent=0 // pred_region
    _
  $region17: #{conv_discriminator.1} parent=0 // pred_fallthru
    _
  // Predicated region
  $region18: #{conv_discriminator.1} parent=0 // pred_check
    _
  $region19: #{conv_discriminator.1} parent=0 // pred_check_branch
    %21 = sbr.rel (0) target = $region21
  $region20: #{conv_discriminator.1} parent=0 // pred_region
    _
  $region21: #{conv_discriminator.1} parent=0 // pred_fallthru
    _
  // Predicated region
  $region22: #{conv_discriminator.1} parent=0 // pred_check
    _
  $region23: #{conv_discriminator.1} parent=0 // pred_check_branch
    %23 = sbr.rel (0) target = $region25
  $region24: #{conv_discriminator.1} parent=0 // pred_region
    _
  $region25: #{conv_discriminator.1} parent=0 // pred_fallthru
    _
  // Predicated region
  $region26: #{conv_discriminator.1} parent=0 // pred_check
    _
  $region27: #{conv_discriminator.1} parent=0 // pred_check_branch
    %25 = sbr.rel (0) target = $region29
  $region28: #{conv_discriminator.1} parent=0 // pred_region
    _
  $region29: #{conv_discriminator.1} parent=0 // pred_fallthru
    _
  %v27 = vld [vmem:[%s0] sm:$0xff]
  %v28 = vld [vmem:[%s0 + $0x8] sm:$0xff]
  %v29 = vpack.c.bf16 %v28, %v27
  %v30 = vld [vmem:[%s1] sm:$0xf]
  %v31 = vld [vmem:[%s1 + $0x4] sm:$0xf]
  %v32 = vld [vmem:[%s1 + $0x8] sm:$0xf]
  %v33 = vld [vmem:[%s1 + $0xc] sm:$0xf]
  %v34 = vld [vmem:[%s2] sm:$0x1]
  %v36 = vlaneseq
  %v37 = vshrl.u32 %v36, 7
  %v38 = vsub.s32 0, %v37
  %v39 = vrot.slane %v34, %v38
  %v45 = vunpack.c.l.b16 %v30
  %v46 = vunpack.c.l.b16 %v31
  %v47 = vunpack.c.l.b16 %v32
  %v48 = vunpack.c.l.b16 %v33
  %v49 = vpack.c.b16 %v46, %v45
  %v50 = vpack.c.b16 %v48, %v47
  %vm53 = vcmask 261120
  %v55 = vsel %vm53, %v29, 0
  %57 = vmatprep.subr.bf16.mxu0 0
  %58 = vmatpush1.bf16.msra.mxu0 %v49
  %59 = vmatprep.subr.bf16.mxu0 0
  %60 = vmatpush1.bf16.msra.mxu0 %v50
  %61 = vmatprep.subr.bf16.mxu0 0
  %62 = vmatpush1.bf16.msra.mxu0 0
  %63 = vmatprep.subr.bf16.mxu0 0
  %64 = vmatpush1.bf16.msra.mxu0 0
  %65 = vmatprep.subr.bf16.mxu0 0
  %66 = vmatpush1.bf16.msra.mxu0 0
  %67 = vmatprep.subr.bf16.mxu0 0
  %68 = vmatpush1.bf16.msra.mxu0 0
  %69 = vmatprep.subr.bf16.mxu0 0
  %70 = vmatpush1.bf16.msra.mxu0 0
  %71 = vmatprep.subr.bf16.mxu0 0
  %72 = vmatpush1.bf16.msra.mxu0 0
  %73 = vmatprep.subr.bf16.mxu0 0
  %74 = vmatpush1.bf16.msra.mxu0 0
  %75 = vmatprep.subr.bf16.mxu0 0
  %76 = vmatpush1.bf16.msra.mxu0 0
  %77 = vmatprep.subr.bf16.mxu0 0
  %78 = vmatpush1.bf16.msra.mxu0 0
  %79 = vmatprep.subr.bf16.mxu0 0
  %80 = vmatpush1.bf16.msra.mxu0 0
  %81 = vmatprep.subr.bf16.mxu0 0
  %82 = vmatpush1.bf16.msra.mxu0 0
  %83 = vmatprep.subr.bf16.mxu0 0
  %84 = vmatpush1.bf16.msra.mxu0 0
  %85 = vmatprep.subr.bf16.mxu0 0
  %86 = vmatpush1.bf16.msra.mxu0 0
  %87 = vmatprep.subr.bf16.mxu0 0
  %88 = vmatpush1.bf16.msra.mxu0 0
  %89 = vmatprep.mubr.bf16.mxu0 0
  %90 = vmatmul.mubr.bf16.gmra.mrb[0].mxu0 %v55
  %v91 = vpop.f32.mrb[0].mxu0
  %v92 = vadd.f32 %v39, %v91
  %v93 = vpop.f32.mrb[0].mxu0
  %v94 = vpop.f32.mrb[0].mxu0
  %v95 = vadd.f32 %v39, %v94
  %v96 = vpop.f32.mrb[0].mxu0
  %97 = vdwg.mxu0
  %vm98 = vcmp.gt.f32.partialorder %v92, 0.0
  %vm99 = vcmp.gt.f32.partialorder %v95, 0.0
  %v100 = vmul.f32 %v92, 0.01
  %v101 = vmul.f32 %v95, 0.01
  %v102 = vsel %vm98, %v92, %v100
  %v103 = vsel %vm99, %v95, %v101
  %v104 = vld [vmem:[%s3] sm:$0xf]
  %v105 = vld [vmem:[%s3 + $0x4] sm:$0xf]
  %v106 = vld [vmem:[%s3 + $0x8] sm:$0xf]
  %v107 = vld [vmem:[%s3 + $0xc] sm:$0xf]
  %v108 = vld [vmem:[%s3 + $0x10] sm:$0xf]
  %v109 = vld [vmem:[%s3 + $0x14] sm:$0xf]
  %v110 = vld [vmem:[%s3 + $0x18] sm:$0xf]
  %v111 = vld [vmem:[%s3 + $0x1c] sm:$0xf]
  %v112 = vld [vmem:[%s3 + $0x20] sm:$0xf]
  %v113 = vld [vmem:[%s3 + $0x24] sm:$0xf]
  %v114 = vld [vmem:[%s3 + $0x28] sm:$0xf]
  %v115 = vld [vmem:[%s3 + $0x2c] sm:$0xf]
  %v116 = vld [vmem:[%s3 + $0x30] sm:$0xf]
  %v117 = vld [vmem:[%s3 + $0x34] sm:$0xf]
  %v118 = vld [vmem:[%s3 + $0x38] sm:$0xf]
  %v119 = vld [vmem:[%s3 + $0x3c] sm:$0xf]
  %v120 = vld [vmem:[%s4] sm:$0x1]
  %v122 = vlaneseq
  %v123 = vshrl.u32 %v122, 7
  %v124 = vsub.s32 0, %v123
  %v125 = vrot.slane %v120, %v124
  %v127 = vpack.c.bf16 %v103, %v102
  %v144 = vunpack.c.l.b16 %v104
  %v145 = vunpack.c.l.b16 %v105
  %v146 = vunpack.c.l.b16 %v106
  %v147 = vunpack.c.l.b16 %v107
  %v148 = vunpack.c.l.b16 %v108
  %v149 = vunpack.c.l.b16 %v109
  %v150 = vunpack.c.l.b16 %v110
  %v151 = vunpack.c.l.b16 %v111
  %v152 = vunpack.c.l.b16 %v112
  %v153 = vunpack.c.l.b16 %v113
  %v154 = vunpack.c.l.b16 %v114
  %v155 = vunpack.c.l.b16 %v115
  %v156 = vunpack.c.l.b16 %v116
  %v157 = vunpack.c.l.b16 %v117
  %v158 = vunpack.c.l.b16 %v118
  %v159 = vunpack.c.l.b16 %v119
  %v160 = vpack.c.b16 %v145, %v144
  %v161 = vpack.c.b16 %v147, %v146
  %v162 = vpack.c.b16 %v149, %v148
  %v163 = vpack.c.b16 %v151, %v150
  %v164 = vpack.c.b16 %v153, %v152
  %v165 = vpack.c.b16 %v155, %v154
  %v166 = vpack.c.b16 %v157, %v156
  %v167 = vpack.c.b16 %v159, %v158
  %176 = vmatprep.subr.bf16.mxu0 0
  %177 = vmatpush1.bf16.msra.mxu0 %v160
  %178 = vmatprep.subr.bf16.mxu0 0
  %179 = vmatpush1.bf16.msra.mxu0 %v161
  %180 = vmatprep.subr.bf16.mxu0 0
  %181 = vmatpush1.bf16.msra.mxu0 %v162
  %182 = vmatprep.subr.bf16.mxu0 0
  %183 = vmatpush1.bf16.msra.mxu0 %v163
  %184 = vmatprep.subr.bf16.mxu0 0
  %185 = vmatpush1.bf16.msra.mxu0 %v164
  %186 = vmatprep.subr.bf16.mxu0 0
  %187 = vmatpush1.bf16.msra.mxu0 %v165
  %188 = vmatprep.subr.bf16.mxu0 0
  %189 = vmatpush1.bf16.msra.mxu0 %v166
  %190 = vmatprep.subr.bf16.mxu0 0
  %191 = vmatpush1.bf16.msra.mxu0 %v167
  %192 = vmatprep.subr.bf16.mxu0 0
  %193 = vmatpush1.bf16.msra.mxu0 0
  %194 = vmatprep.subr.bf16.mxu0 0
  %195 = vmatpush1.bf16.msra.mxu0 0
  %196 = vmatprep.subr.bf16.mxu0 0
  %197 = vmatpush1.bf16.msra.mxu0 0
  %198 = vmatprep.subr.bf16.mxu0 0
  %199 = vmatpush1.bf16.msra.mxu0 0
  %200 = vmatprep.subr.bf16.mxu0 0
  %201 = vmatpush1.bf16.msra.mxu0 0
  %202 = vmatprep.subr.bf16.mxu0 0
  %203 = vmatpush1.bf16.msra.mxu0 0
  %204 = vmatprep.subr.bf16.mxu0 0
  %205 = vmatpush1.bf16.msra.mxu0 0
  %206 = vmatprep.subr.bf16.mxu0 0
  %207 = vmatpush1.bf16.msra.mxu0 0
  %208 = vmatprep.mubr.bf16.mxu0 0
  %209 = vmatmul.mubr.bf16.gmra.mrb[0].mxu0 %v127
  %v210 = vpop.f32.mrb[0].mxu0
  %v211 = vadd.f32 %v125, %v210
  %v212 = vpop.f32.mrb[0].mxu0
  %v213 = vpop.f32.mrb[0].mxu0
  %v214 = vadd.f32 %v125, %v213
  %v215 = vpop.f32.mrb[0].mxu0
  %216 = vdwg.mxu0
  %vm217 = vcmp.gt.f32.partialorder %v211, 0.0
  %vm218 = vcmp.gt.f32.partialorder %v214, 0.0
  %v219 = vmul.f32 %v211, 0.01
  %v220 = vmul.f32 %v214, 0.01
  %v221 = vsel %vm217, %v211, %v219
  %v222 = vsel %vm218, %v214, %v220
  %v223 = vadd.f32 %v102, %v221
  %v224 = vadd.f32 %v103, %v222
  %v225 = vpack.c.bf16 %v224, %v223
  %226 = vmatprep.subr.bf16.mxu0 0
  %227 = vmatpush1.bf16.msra.mxu0 %v160
  %228 = vmatprep.subr.bf16.mxu0 0
  %229 = vmatpush1.bf16.msra.mxu0 %v161
  %230 = vmatprep.subr.bf16.mxu0 0
  %231 = vmatpush1.bf16.msra.mxu0 %v162
  %232 = vmatprep.subr.bf16.mxu0 0
  %233 = vmatpush1.bf16.msra.mxu0 %v163
  %234 = vmatprep.subr.bf16.mxu0 0
  %235 = vmatpush1.bf16.msra.mxu0 %v164
  %236 = vmatprep.subr.bf16.mxu0 0
  %237 = vmatpush1.bf16.msra.mxu0 %v165
  %238 = vmatprep.subr.bf16.mxu0 0
  %239 = vmatpush1.bf16.msra.mxu0 %v166
  %240 = vmatprep.subr.bf16.mxu0 0
  %241 = vmatpush1.bf16.msra.mxu0 %v167
  %242 = vmatprep.subr.bf16.mxu0 0
  %243 = vmatpush1.bf16.msra.mxu0 0
  %244 = vmatprep.subr.bf16.mxu0 0
  %245 = vmatpush1.bf16.msra.mxu0 0
  %246 = vmatprep.subr.bf16.mxu0 0
  %247 = vmatpush1.bf16.msra.mxu0 0
  %248 = vmatprep.subr.bf16.mxu0 0
  %249 = vmatpush1.bf16.msra.mxu0 0
  %250 = vmatprep.subr.bf16.mxu0 0
  %251 = vmatpush1.bf16.msra.mxu0 0
  %252 = vmatprep.subr.bf16.mxu0 0
  %253 = vmatpush1.bf16.msra.mxu0 0
  %254 = vmatprep.subr.bf16.mxu0 0
  %255 = vmatpush1.bf16.msra.mxu0 0
  %256 = vmatprep.subr.bf16.mxu0 0
  %257 = vmatpush1.bf16.msra.mxu0 0
  %258 = vmatprep.mubr.bf16.mxu0 0
  %259 = vmatmul.mubr.bf16.gmra.mrb[0].mxu0 %v225
  %v260 = vpop.f32.mrb[0].mxu0
  %v261 = vadd.f32 %v125, %v260
  %v262 = vpop.f32.mrb[0].mxu0
  %v263 = vpop.f32.mrb[0].mxu0
  %v264 = vadd.f32 %v125, %v263
  %v265 = vpop.f32.mrb[0].mxu0
  %266 = vdwg.mxu0
  %vm267 = vcmp.gt.f32.partialorder %v261, 0.0
  %vm268 = vcmp.gt.f32.partialorder %v264, 0.0
  %v269 = vmul.f32 %v261, 0.01
  %v270 = vmul.f32 %v264, 0.01
  %v271 = vsel %vm267, %v261, %v269
  %v272 = vsel %vm268, %v264, %v270
  %v273 = vadd.f32 %v223, %v271
  %v274 = vadd.f32 %v224, %v272
  %v275 = vpack.c.bf16 %v274, %v273
  %276 = vmatprep.subr.bf16.mxu0 0
  %277 = vmatpush1.bf16.msra.mxu0 %v160
  %278 = vmatprep.subr.bf16.mxu0 0
  %279 = vmatpush1.bf16.msra.mxu0 %v161
  %280 = vmatprep.subr.bf16.mxu0 0
  %281 = vmatpush1.bf16.msra.mxu0 %v162
  %282 = vmatprep.subr.bf16.mxu0 0
  %283 = vmatpush1.bf16.msra.mxu0 %v163
  %284 = vmatprep.subr.bf16.mxu0 0
  %285 = vmatpush1.bf16.msra.mxu0 %v164
  %286 = vmatprep.subr.bf16.mxu0 0
  %287 = vmatpush1.bf16.msra.mxu0 %v165
  %288 = vmatprep.subr.bf16.mxu0 0
  %289 = vmatpush1.bf16.msra.mxu0 %v166
  %290 = vmatprep.subr.bf16.mxu0 0
  %291 = vmatpush1.bf16.msra.mxu0 %v167
  %292 = vmatprep.subr.bf16.mxu0 0
  %293 = vmatpush1.bf16.msra.mxu0 0
  %294 = vmatprep.subr.bf16.mxu0 0
  %295 = vmatpush1.bf16.msra.mxu0 0
  %296 = vmatprep.subr.bf16.mxu0 0
  %297 = vmatpush1.bf16.msra.mxu0 0
  %298 = vmatprep.subr.bf16.mxu0 0
  %299 = vmatpush1.bf16.msra.mxu0 0
  %300 = vmatprep.subr.bf16.mxu0 0
  %301 = vmatpush1.bf16.msra.mxu0 0
  %302 = vmatprep.subr.bf16.mxu0 0
  %303 = vmatpush1.bf16.msra.mxu0 0
  %304 = vmatprep.subr.bf16.mxu0 0
  %305 = vmatpush1.bf16.msra.mxu0 0
  %306 = vmatprep.subr.bf16.mxu0 0
  %307 = vmatpush1.bf16.msra.mxu0 0
  %308 = vmatprep.mubr.bf16.mxu0 0
  %309 = vmatmul.mubr.bf16.gmra.mrb[0].mxu0 %v275
  %v310 = vpop.f32.mrb[0].mxu0
  %v311 = vadd.f32 %v125, %v310
  %v312 = vpop.f32.mrb[0].mxu0
  %v313 = vpop.f32.mrb[0].mxu0
  %v314 = vadd.f32 %v125, %v313
  %v315 = vpop.f32.mrb[0].mxu0
  %316 = vdwg.mxu0
  %vm317 = vcmp.gt.f32.partialorder %v311, 0.0
  %vm318 = vcmp.gt.f32.partialorder %v314, 0.0
  %v319 = vmul.f32 %v311, 0.01
  %v320 = vmul.f32 %v314, 0.01
  %v321 = vsel %vm317, %v311, %v319
  %v322 = vsel %vm318, %v314, %v320
  %v323 = vadd.f32 %v273, %v321
  %v324 = vadd.f32 %v274, %v322
  %v325 = vpack.c.bf16 %v324, %v323
  %326 = vmatprep.subr.bf16.mxu0 0
  %327 = vmatpush1.bf16.msra.mxu0 %v160
  %328 = vmatprep.subr.bf16.mxu0 0
  %329 = vmatpush1.bf16.msra.mxu0 %v161
  %330 = vmatprep.subr.bf16.mxu0 0
  %331 = vmatpush1.bf16.msra.mxu0 %v162
  %332 = vmatprep.subr.bf16.mxu0 0
  %333 = vmatpush1.bf16.msra.mxu0 %v163
  %334 = vmatprep.subr.bf16.mxu0 0
  %335 = vmatpush1.bf16.msra.mxu0 %v164
  %336 = vmatprep.subr.bf16.mxu0 0
  %337 = vmatpush1.bf16.msra.mxu0 %v165
  %338 = vmatprep.subr.bf16.mxu0 0
  %339 = vmatpush1.bf16.msra.mxu0 %v166
  %340 = vmatprep.subr.bf16.mxu0 0
  %341 = vmatpush1.bf16.msra.mxu0 %v167
  %342 = vmatprep.subr.bf16.mxu0 0
  %343 = vmatpush1.bf16.msra.mxu0 0
  %344 = vmatprep.subr.bf16.mxu0 0
  %345 = vmatpush1.bf16.msra.mxu0 0
  %346 = vmatprep.subr.bf16.mxu0 0
  %347 = vmatpush1.bf16.msra.mxu0 0
  %348 = vmatprep.subr.bf16.mxu0 0
  %349 = vmatpush1.bf16.msra.mxu0 0
  %350 = vmatprep.subr.bf16.mxu0 0
  %351 = vmatpush1.bf16.msra.mxu0 0
  %352 = vmatprep.subr.bf16.mxu0 0
  %353 = vmatpush1.bf16.msra.mxu0 0
  %354 = vmatprep.subr.bf16.mxu0 0
  %355 = vmatpush1.bf16.msra.mxu0 0
  %356 = vmatprep.subr.bf16.mxu0 0
  %357 = vmatpush1.bf16.msra.mxu0 0
  %358 = vmatprep.mubr.bf16.mxu0 0
  %359 = vmatmul.mubr.bf16.gmra.mrb[0].mxu0 %v325
  %v360 = vpop.f32.mrb[0].mxu0
  %v361 = vadd.f32 %v125, %v360
  %v362 = vpop.f32.mrb[0].mxu0
  %v363 = vpop.f32.mrb[0].mxu0
  %v364 = vadd.f32 %v125, %v363
  %v365 = vpop.f32.mrb[0].mxu0
  %366 = vdwg.mxu0
  %vm367 = vcmp.gt.f32.partialorder %v361, 0.0
  %vm368 = vcmp.gt.f32.partialorder %v364, 0.0
  %v369 = vmul.f32 %v361, 0.01
  %v370 = vmul.f32 %v364, 0.01
  %v371 = vsel %vm367, %v361, %v369
  %v372 = vsel %vm368, %v364, %v370
  %v373 = vadd.f32 %v323, %v371
  %v374 = vadd.f32 %v324, %v372
  %v375 = vpack.c.bf16 %v374, %v373
  %376 = vmatprep.subr.bf16.mxu0 0
  %377 = vmatpush1.bf16.msra.mxu0 %v160
  %378 = vmatprep.subr.bf16.mxu0 0
  %379 = vmatpush1.bf16.msra.mxu0 %v161
  %380 = vmatprep.subr.bf16.mxu0 0
  %381 = vmatpush1.bf16.msra.mxu0 %v162
  %382 = vmatprep.subr.bf16.mxu0 0
  %383 = vmatpush1.bf16.msra.mxu0 %v163
  %384 = vmatprep.subr.bf16.mxu0 0
  %385 = vmatpush1.bf16.msra.mxu0 %v164
  %386 = vmatprep.subr.bf16.mxu0 0
  %387 = vmatpush1.bf16.msra.mxu0 %v165
  %388 = vmatprep.subr.bf16.mxu0 0
  %389 = vmatpush1.bf16.msra.mxu0 %v166
  %390 = vmatprep.subr.bf16.mxu0 0
  %391 = vmatpush1.bf16.msra.mxu0 %v167
  %392 = vmatprep.subr.bf16.mxu0 0
  %393 = vmatpush1.bf16.msra.mxu0 0
  %394 = vmatprep.subr.bf16.mxu0 0
  %395 = vmatpush1.bf16.msra.mxu0 0
  %396 = vmatprep.subr.bf16.mxu0 0
  %397 = vmatpush1.bf16.msra.mxu0 0
  %398 = vmatprep.subr.bf16.mxu0 0
  %399 = vmatpush1.bf16.msra.mxu0 0
  %400 = vmatprep.subr.bf16.mxu0 0
  %401 = vmatpush1.bf16.msra.mxu0 0
  %402 = vmatprep.subr.bf16.mxu0 0
  %403 = vmatpush1.bf16.msra.mxu0 0
  %404 = vmatprep.subr.bf16.mxu0 0
  %405 = vmatpush1.bf16.msra.mxu0 0
  %406 = vmatprep.subr.bf16.mxu0 0
  %407 = vmatpush1.bf16.msra.mxu0 0
  %408 = vmatprep.mubr.bf16.mxu0 0
  %409 = vmatmul.mubr.bf16.gmra.mrb[0].mxu0 %v375
  %v410 = vpop.f32.mrb[0].mxu0
  %v411 = vadd.f32 %v125, %v410
  %v412 = vpop.f32.mrb[0].mxu0
  %v413 = vpop.f32.mrb[0].mxu0
  %v414 = vadd.f32 %v125, %v413
  %v415 = vpop.f32.mrb[0].mxu0
  %416 = vdwg.mxu0
  %vm417 = vcmp.gt.f32.partialorder %v411, 0.0
  %vm418 = vcmp.gt.f32.partialorder %v414, 0.0
  %v419 = vmul.f32 %v411, 0.01
  %v420 = vmul.f32 %v414, 0.01
  %v421 = vsel %vm417, %v411, %v419
  %v422 = vsel %vm418, %v414, %v420
  %v423 = vadd.f32 %v373, %v421
  %v424 = vadd.f32 %v374, %v422
  %v425 = vpack.c.bf16 %v424, %v423
  %426 = vmatprep.subr.bf16.mxu0 0
  %427 = vmatpush1.bf16.msra.mxu0 %v160
  %428 = vmatprep.subr.bf16.mxu0 0
  %429 = vmatpush1.bf16.msra.mxu0 %v161
  %430 = vmatprep.subr.bf16.mxu0 0
  %431 = vmatpush1.bf16.msra.mxu0 %v162
  %432 = vmatprep.subr.bf16.mxu0 0
  %433 = vmatpush1.bf16.msra.mxu0 %v163
  %434 = vmatprep.subr.bf16.mxu0 0
  %435 = vmatpush1.bf16.msra.mxu0 %v164
  %436 = vmatprep.subr.bf16.mxu0 0
  %437 = vmatpush1.bf16.msra.mxu0 %v165
  %438 = vmatprep.subr.bf16.mxu0 0
  %439 = vmatpush1.bf16.msra.mxu0 %v166
  %440 = vmatprep.subr.bf16.mxu0 0
  %441 = vmatpush1.bf16.msra.mxu0 %v167
  %442 = vmatprep.subr.bf16.mxu0 0
  %443 = vmatpush1.bf16.msra.mxu0 0
  %444 = vmatprep.subr.bf16.mxu0 0
  %445 = vmatpush1.bf16.msra.mxu0 0
  %446 = vmatprep.subr.bf16.mxu0 0
  %447 = vmatpush1.bf16.msra.mxu0 0
  %448 = vmatprep.subr.bf16.mxu0 0
  %449 = vmatpush1.bf16.msra.mxu0 0
  %450 = vmatprep.subr.bf16.mxu0 0
  %451 = vmatpush1.bf16.msra.mxu0 0
  %452 = vmatprep.subr.bf16.mxu0 0
  %453 = vmatpush1.bf16.msra.mxu0 0
  %454 = vmatprep.subr.bf16.mxu0 0
  %455 = vmatpush1.bf16.msra.mxu0 0
  %456 = vmatprep.subr.bf16.mxu0 0
  %457 = vmatpush1.bf16.msra.mxu0 0
  %458 = vmatprep.mubr.bf16.mxu0 0
  %459 = vmatmul.mubr.bf16.gmra.mrb[0].mxu0 %v425
  %v460 = vpop.f32.mrb[0].mxu0
  %v461 = vadd.f32 %v125, %v460
  %v462 = vpop.f32.mrb[0].mxu0
  %v463 = vpop.f32.mrb[0].mxu0
  %v464 = vadd.f32 %v125, %v463
  %v465 = vpop.f32.mrb[0].mxu0
  %466 = vdwg.mxu0
  %vm467 = vcmp.gt.f32.partialorder %v461, 0.0
  %vm468 = vcmp.gt.f32.partialorder %v464, 0.0
  %v469 = vmul.f32 %v461, 0.01
  %v470 = vmul.f32 %v464, 0.01
  %v471 = vsel %vm467, %v461, %v469
  %v472 = vsel %vm468, %v464, %v470
  %v473 = vadd.f32 %v423, %v471
  %v474 = vadd.f32 %v424, %v472
  %v475 = vpack.c.bf16 %v474, %v473
  %476 = vmatprep.subr.bf16.mxu0 0
  %477 = vmatpush1.bf16.msra.mxu0 %v160
  %478 = vmatprep.subr.bf16.mxu0 0
  %479 = vmatpush1.bf16.msra.mxu0 %v161
  %480 = vmatprep.subr.bf16.mxu0 0
  %481 = vmatpush1.bf16.msra.mxu0 %v162
  %482 = vmatprep.subr.bf16.mxu0 0
  %483 = vmatpush1.bf16.msra.mxu0 %v163
  %484 = vmatprep.subr.bf16.mxu0 0
  %485 = vmatpush1.bf16.msra.mxu0 %v164
  %486 = vmatprep.subr.bf16.mxu0 0
  %487 = vmatpush1.bf16.msra.mxu0 %v165
  %488 = vmatprep.subr.bf16.mxu0 0
  %489 = vmatpush1.bf16.msra.mxu0 %v166
  %490 = vmatprep.subr.bf16.mxu0 0
  %491 = vmatpush1.bf16.msra.mxu0 %v167
  %492 = vmatprep.subr.bf16.mxu0 0
  %493 = vmatpush1.bf16.msra.mxu0 0
  %494 = vmatprep.subr.bf16.mxu0 0
  %495 = vmatpush1.bf16.msra.mxu0 0
  %496 = vmatprep.subr.bf16.mxu0 0
  %497 = vmatpush1.bf16.msra.mxu0 0
  %498 = vmatprep.subr.bf16.mxu0 0
  %499 = vmatpush1.bf16.msra.mxu0 0
  %500 = vmatprep.subr.bf16.mxu0 0
  %501 = vmatpush1.bf16.msra.mxu0 0
  %502 = vmatprep.subr.bf16.mxu0 0
  %503 = vmatpush1.bf16.msra.mxu0 0
  %504 = vmatprep.subr.bf16.mxu0 0
  %505 = vmatpush1.bf16.msra.mxu0 0
  %506 = vmatprep.subr.bf16.mxu0 0
  %507 = vmatpush1.bf16.msra.mxu0 0
  %508 = vmatprep.mubr.bf16.mxu0 0
  %509 = vmatmul.mubr.bf16.gmra.mrb[0].mxu0 %v475
  %v510 = vpop.f32.mrb[0].mxu0
  %v511 = vadd.f32 %v125, %v510
  %v512 = vpop.f32.mrb[0].mxu0
  %v513 = vpop.f32.mrb[0].mxu0
  %v514 = vadd.f32 %v125, %v513
  %v515 = vpop.f32.mrb[0].mxu0
  %516 = vdwg.mxu0
  %vm517 = vcmp.gt.f32.partialorder %v511, 0.0
  %vm518 = vcmp.gt.f32.partialorder %v514, 0.0
  %v519 = vmul.f32 %v511, 0.01
  %v520 = vmul.f32 %v514, 0.01
  %v521 = vsel %vm517, %v511, %v519
  %v522 = vsel %vm518, %v514, %v520
  %v523 = vadd.f32 %v473, %v521
  %v524 = vadd.f32 %v474, %v522
  %v525 = vpack.c.bf16 %v524, %v523
  %v526 = vld [vmem:[%s5] sm:$0xf]
  %v527 = vld [vmem:[%s5 + $0x4] sm:$0xf]
  %v528 = vld [vmem:[%s5 + $0x8] sm:$0xf]
  %v529 = vld [vmem:[%s5 + $0xc] sm:$0xf]
  %v530 = vld [vmem:[%s5 + $0x10] sm:$0xf]
  %v531 = vld [vmem:[%s5 + $0x14] sm:$0xf]
  %v532 = vld [vmem:[%s5 + $0x18] sm:$0xf]
  %v533 = vld [vmem:[%s5 + $0x1c] sm:$0xf]
  %v534 = vld [vmem:[%s5 + $0x20] sm:$0xf]
  %v535 = vld [vmem:[%s5 + $0x24] sm:$0xf]
  %v536 = vld [vmem:[%s5 + $0x28] sm:$0xf]
  %v537 = vld [vmem:[%s5 + $0x2c] sm:$0xf]
  %v538 = vld [vmem:[%s5 + $0x30] sm:$0xf]
  %v539 = vld [vmem:[%s5 + $0x34] sm:$0xf]
  %v540 = vld [vmem:[%s5 + $0x38] sm:$0xf]
  %v541 = vld [vmem:[%s5 + $0x3c] sm:$0xf]
  %v542 = vld [vmem:[%s6] sm:$0x1]
  %v544 = vlaneseq
  %v545 = vshrl.u32 %v544, 7
  %v546 = vsub.s32 0, %v545
  %v547 = vrot.slane %v542, %v546
  %v565 = vunpack.c.l.b16 %v526
  %v566 = vunpack.c.l.b16 %v527
  %v567 = vunpack.c.l.b16 %v528
  %v568 = vunpack.c.l.b16 %v529
  %v569 = vunpack.c.l.b16 %v530
  %v570 = vunpack.c.l.b16 %v531
  %v571 = vunpack.c.l.b16 %v532
  %v572 = vunpack.c.l.b16 %v533
  %v573 = vunpack.c.l.b16 %v534
  %v574 = vunpack.c.l.b16 %v535
  %v575 = vunpack.c.l.b16 %v536
  %v576 = vunpack.c.l.b16 %v537
  %v577 = vunpack.c.l.b16 %v538
  %v578 = vunpack.c.l.b16 %v539
  %v579 = vunpack.c.l.b16 %v540
  %v580 = vunpack.c.l.b16 %v541
  %v581 = vpack.c.b16 %v566, %v565
  %v582 = vpack.c.b16 %v568, %v567
  %v583 = vpack.c.b16 %v570, %v569
  %v584 = vpack.c.b16 %v572, %v571
  %v585 = vpack.c.b16 %v574, %v573
  %v586 = vpack.c.b16 %v576, %v575
  %v587 = vpack.c.b16 %v578, %v577
  %v588 = vpack.c.b16 %v580, %v579
  %597 = vmatprep.subr.bf16.mxu0 0
  %598 = vmatpush1.bf16.msra.mxu0 %v581
  %599 = vmatprep.subr.bf16.mxu0 0
  %600 = vmatpush1.bf16.msra.mxu0 %v582
  %601 = vmatprep.subr.bf16.mxu0 0
  %602 = vmatpush1.bf16.msra.mxu0 %v583
  %603 = vmatprep.subr.bf16.mxu0 0
  %604 = vmatpush1.bf16.msra.mxu0 %v584
  %605 = vmatprep.subr.bf16.mxu0 0
  %606 = vmatpush1.bf16.msra.mxu0 %v585
  %607 = vmatprep.subr.bf16.mxu0 0
  %608 = vmatpush1.bf16.msra.mxu0 %v586
  %609 = vmatprep.subr.bf16.mxu0 0
  %610 = vmatpush1.bf16.msra.mxu0 %v587
  %611 = vmatprep.subr.bf16.mxu0 0
  %612 = vmatpush1.bf16.msra.mxu0 %v588
  %613 = vmatprep.subr.bf16.mxu0 0
  %614 = vmatpush1.bf16.msra.mxu0 0
  %615 = vmatprep.subr.bf16.mxu0 0
  %616 = vmatpush1.bf16.msra.mxu0 0
  %617 = vmatprep.subr.bf16.mxu0 0
  %618 = vmatpush1.bf16.msra.mxu0 0
  %619 = vmatprep.subr.bf16.mxu0 0
  %620 = vmatpush1.bf16.msra.mxu0 0
  %621 = vmatprep.subr.bf16.mxu0 0
  %622 = vmatpush1.bf16.msra.mxu0 0
  %623 = vmatprep.subr.bf16.mxu0 0
  %624 = vmatpush1.bf16.msra.mxu0 0
  %625 = vmatprep.subr.bf16.mxu0 0
  %626 = vmatpush1.bf16.msra.mxu0 0
  %627 = vmatprep.subr.bf16.mxu0 0
  %628 = vmatpush1.bf16.msra.mxu0 0
  %629 = vmatprep.mubr.bf16.mxu0 0
  %630 = vmatmul.mubr.bf16.gmra.mrb[0].mxu0 %v525
  %v631 = vpop.f32.mrb[0].mxu0
  %v632 = vadd.f32 %v547, %v631
  %v633 = vpop.f32.mrb[0].mxu0
  %v634 = vpop.f32.mrb[0].mxu0
  %v635 = vadd.f32 %v547, %v634
  %v636 = vpop.f32.mrb[0].mxu0
  %637 = vdwg.mxu0
  %638 = vst [vmem:[%s7] sm:$0xff] %v632
  %639 = vst [vmem:[%s7 + $0x8] sm:$0xff] %v635
  // Predicated region
  $region30: #{conv_discriminator.1} parent=0 // pred_check
    _
  $region31: #{conv_discriminator.1} parent=0 // pred_check_branch
    %641 = sbr.rel (0) target = $region33
  $region32: #{conv_discriminator.1} parent=0 // pred_region
    _
  $region33: #{conv_discriminator.1} parent=0 // pred_fallthru
    _
  // Predicated region
  $region34: #{conv_discriminator.1} parent=0 // pred_check
    _
  $region35: #{conv_discriminator.1} parent=0 // pred_check_branch
    %643 = sbr.rel (0) target = $region37
  $region36: #{conv_discriminator.1} parent=0 // pred_region
    _
  $region37: #{conv_discriminator.1} parent=0 // pred_fallthru
    _

</llo_original>
